<compile_context>
chip_gen: v7x
topology: tpu7x:2x2x1
jax: 0.10.0
libtpu: 0.0.40
codegen_flags: <defaults>
</compile_context>

<pallas_src>
import jax
import jax.numpy as jnp
from jax.experimental import pallas as pl
from jax.experimental.pallas import tpu as pltpu


def _make_dense_kernel(x_ref, a_ref, b_ref, o_ref, xs_ref):
    # x_ref : (N, Cin, H, W)            NCHW input, untouched by the wrapper
    # a_ref : (K*Cin*W, Cout*W)         banded weights: width taps AND height taps folded
    # b_ref : (1, Cout*W)               bias tiled per (co, w) output column
    # o_ref : (N, H, (Cin+Cout)*W)      lane-dense "NHCW" concat output
    # xs_ref: (N*Hp, Cin*W)             VMEM scratch: batched, height-padded row slab
    N, Cin, H, W = x_ref.shape
    cin_w = Cin * W
    K = a_ref.shape[0] // cin_w
    pad = (K - 1) // 2
    Hp = H + 2 * pad
    R = N * Hp - 2 * pad              # rows of the single fused matmul (all batches)

    # NCHW -> batched row slab with zero height halos (pure in-VMEM block stores;
    # the halo rows between batches keep the height taps from mixing batches).
    xs_ref[...] = jnp.zeros_like(xs_ref)
    for n in range(N):
        base = n * Hp + pad
        for ci in range(Cin):
            xs_ref[base:base + H, ci * W:(ci + 1) * W] = x_ref[n, ci]

    # Conv as ONE fat matmul: lane-concat the K height-shifted views so the contraction
    # becomes K*Cin*W (=192); width taps / width "same" padding live in the banded a_ref.
    x3 = jnp.concatenate([xs_ref[kh:kh + R, :] for kh in range(K)], axis=-1)
    acc = jnp.dot(x3, a_ref[...], preferred_element_type=jnp.float32)
    acc = jnp.maximum(acc + b_ref[...], 0.0)          # fused bias + ReLU

    # Fused concat([x, conv], channel axis): one full-width lane-dense store per batch.
    for n in range(N):
        x_rows = xs_ref[n * Hp + pad:n * Hp + pad + H, :]        # (H, Cin*W)
        conv_rows = acc[n * Hp:n * Hp + H, :]                    # (H, Cout*W)
        o_ref[n] = jnp.concatenate(
            [x_rows, conv_rows.astype(o_ref.dtype)], axis=-1)


def _build_banded_weights(weight_oikk, W):
    """Fold kw taps (and zero width padding) into a banded matrix, stacked over kh.

    Returns A of shape (K*Cin*W, Cout*W) with
        A[kh*Cin*W + ci*W + w', co*W + w] = weight[co, ci, kh, w' - w + pad]  (0 elsewhere)
    so that concat_kh(row(h+kh)) @ A performs the full 2-D convolution for output row h.
    """
    Cout, Cin, Kh, Kw = weight_oikk.shape
    pad = (Kh - 1) // 2
    wt_io = jnp.transpose(weight_oikk, (1, 0, 2, 3)).astype(jnp.float32)  # (Cin,Cout,Kh,Kw)
    blocks = []
    for kh in range(Kh):
        blk = jnp.zeros((Cin, W, Cout, W), dtype=jnp.float32)
        for kw in range(Kw):
            # band[w', w] = 1 iff w' = w + (kw - pad); out-of-range w' has no entry,
            # which reproduces zero "same" padding along the width.
            band = jnp.eye(W, k=pad - kw, dtype=jnp.float32)
            blk = blk + jnp.einsum("io,pw->ipow", wt_io[:, :, kh, kw], band)
        blocks.append(blk.reshape(Cin * W, Cout * W))
    return jnp.concatenate(blocks, axis=0)            # (Kh*Cin*W, Cout*W)


def make_dense_forward(x_nchw, weight_oikk, bias, kernel_size=3):
    """Reproduces make_dense.forward: cat([x, relu(conv(x))], dim=1), NCHW in/out."""
    # NOTE: like nn.Conv2d(padding=(k-1)//2), "same" output size assumes odd kernel_size.
    N, Cin, H, W = x_nchw.shape
    Cout = weight_oikk.shape[0]
    K = kernel_size
    pad = (K - 1) // 2
    Hp = H + 2 * pad
    Ct = Cin + Cout

    A3 = _build_banded_weights(weight_oikk, W)                       # (K*Cin*W, Cout*W)
    brow = jnp.repeat(bias.astype(jnp.float32), W).reshape(1, Cout * W)

    out_nhcw = pl.pallas_call(
        _make_dense_kernel,
        out_shape=jax.ShapeDtypeStruct((N, H, Ct * W), jnp.float32),
        grid_spec=pltpu.PrefetchScalarGridSpec(
            num_scalar_prefetch=0,
            grid=(1,),  # whole (tiny) batch in one step: per-step overhead would dominate
            in_specs=[
                pl.BlockSpec((N, Cin, H, W), lambda i: (0, 0, 0, 0)),
                pl.BlockSpec((K * Cin * W, Cout * W), lambda i: (0, 0)),
                pl.BlockSpec((1, Cout * W), lambda i: (0, 0)),
            ],
            out_specs=pl.BlockSpec((N, H, Ct * W), lambda i: (0, 0, 0)),
            scratch_shapes=[pltpu.VMEM((N * Hp, Cin * W), jnp.float32)],
        ),
        compiler_params=pltpu.CompilerParams(
            dimension_semantics=("arbitrary",)),
    )(x_nchw.astype(jnp.float32), A3, brow)

    # (N, H, Ct*W) -> (N, H, Ct, W) is a free minor-dim split; one tiny transpose to NCHW.
    out = out_nhcw.reshape(N, H, Ct, W)
    return jnp.transpose(out, (0, 2, 1, 3))


def _reference(x_nchw, weight_oikk, bias, kernel_size=3):
    pad = (kernel_size - 1) // 2
    conv = jax.lax.conv_general_dilated(
        x_nchw, weight_oikk, window_strides=(1, 1),
        padding=((pad, pad), (pad, pad)),
        dimension_numbers=("NCHW", "OIHW", "NCHW"))
    conv = jnp.maximum(conv + bias[None, :, None, None], 0.0)
    return jnp.concatenate([x_nchw, conv], axis=1)


if __name__ == "__main__":
    # Small shapes consistent with the module: N=2, nChannels=4, H=W=16, growthRate=8
    N, Cin, H, W = 2, 4, 16, 16
    growth_rate, K = 8, 3

    key = jax.random.PRNGKey(0)
    kx, kw, kb = jax.random.split(key, 3)
    x = jax.random.normal(kx, (N, Cin, H, W), dtype=jnp.float32)
    weight = jax.random.normal(kw, (growth_rate, Cin, K, K), dtype=jnp.float32) * 0.1
    bias = jax.random.normal(kb, (growth_rate,), dtype=jnp.float32) * 0.1

    out = make_dense_forward(x, weight, bias, kernel_size=K)
    out = jax.block_until_ready(out)

    ref = _reference(x, weight, bias, kernel_size=K)
    assert out.shape == (N, Cin + growth_rate, H, W), out.shape
    assert jnp.allclose(out, ref, atol=1e-4, rtol=1e-4)

    print("KERNEL_OK")
</pallas_src>

<mosaic_0001>
module attributes {stable_mosaic.version = 11 : i64} {
  func.func @_make_dense_kernel(%arg0: i32, %arg1: memref<2x4x16x16xf32, #tpu.memory_space<vmem>>, %arg2: memref<192x128xf32, #tpu.memory_space<vmem>>, %arg3: memref<1x128xf32, #tpu.memory_space<vmem>>, %arg4: memref<2x16x192xf32, #tpu.memory_space<vmem>>, %arg5: memref<36x64xf32, #tpu.memory_space<vmem>>) attributes {dimension_semantics = [#tpu.dimension_semantics<arbitrary>], iteration_bounds = array<i64: 1>, scalar_prefetch = 0 : i64, scratch_operands = 1 : i64, tpu.core_type = #tpu.core_type<tc>, window_params = [{pipeline_mode = #tpu.pipeline_mode<synchronous>, transform_indices = @transform_0, window_bounds = array<i64: 2, 4, 16, 16>}, {pipeline_mode = #tpu.pipeline_mode<synchronous>, transform_indices = @transform_1, window_bounds = array<i64: 192, 128>}, {pipeline_mode = #tpu.pipeline_mode<synchronous>, transform_indices = @transform_2, window_bounds = array<i64: 1, 128>}, {pipeline_mode = #tpu.pipeline_mode<synchronous>, transform_indices = @transform_3, window_bounds = array<i64: 2, 16, 192>}]} {
    %cst = arith.constant 0.000000e+00 : f32
    %0 = vector.broadcast %cst : f32 to vector<36x64xf32>
    %c0 = arith.constant 0 : index
    %c0_0 = arith.constant 0 : index
    %1 = vector.load %arg5[%c0, %c0_0] : memref<36x64xf32, #tpu.memory_space<vmem>>, vector<36x64xf32>
    tpu.vector_store %arg5[%c0, %c0_0], %0 {strides = array<i32>} : memref<36x64xf32, #tpu.memory_space<vmem>>, vector<36x64xf32>,
    %c0_1 = arith.constant 0 : index
    %c0_2 = arith.constant 0 : index
    %c0_3 = arith.constant 0 : index
    %c0_4 = arith.constant 0 : index
    %2 = vector.load %arg1[%c0_1, %c0_2, %c0_3, %c0_4] : memref<2x4x16x16xf32, #tpu.memory_space<vmem>>, vector<1x1x16x16xf32>
    %3 = vector.shape_cast %2 : vector<1x1x16x16xf32> to vector<16x16xf32>
    %c1 = arith.constant 1 : index
    %c0_5 = arith.constant 0 : index
    %4 = vector.load %arg5[%c1, %c0_5] : memref<36x64xf32, #tpu.memory_space<vmem>>, vector<16x16xf32>
    tpu.vector_store %arg5[%c1, %c0_5], %3 {strides = array<i32>} : memref<36x64xf32, #tpu.memory_space<vmem>>, vector<16x16xf32>,
    %c0_6 = arith.constant 0 : index
    %c1_7 = arith.constant 1 : index
    %c0_8 = arith.constant 0 : index
    %c0_9 = arith.constant 0 : index
    %5 = vector.load %arg1[%c0_6, %c1_7, %c0_8, %c0_9] : memref<2x4x16x16xf32, #tpu.memory_space<vmem>>, vector<1x1x16x16xf32>
    %6 = vector.shape_cast %5 : vector<1x1x16x16xf32> to vector<16x16xf32>
    %c1_10 = arith.constant 1 : index
    %c16 = arith.constant 16 : index
    %7 = vector.load %arg5[%c1_10, %c16] : memref<36x64xf32, #tpu.memory_space<vmem>>, vector<16x16xf32>
    tpu.vector_store %arg5[%c1_10, %c16], %6 {strides = array<i32>} : memref<36x64xf32, #tpu.memory_space<vmem>>, vector<16x16xf32>,
    %c0_11 = arith.constant 0 : index
    %c2 = arith.constant 2 : index
    %c0_12 = arith.constant 0 : index
    %c0_13 = arith.constant 0 : index
    %8 = vector.load %arg1[%c0_11, %c2, %c0_12, %c0_13] : memref<2x4x16x16xf32, #tpu.memory_space<vmem>>, vector<1x1x16x16xf32>
    %9 = vector.shape_cast %8 : vector<1x1x16x16xf32> to vector<16x16xf32>
    %c1_14 = arith.constant 1 : index
    %c32 = arith.constant 32 : index
    %10 = vector.load %arg5[%c1_14, %c32] : memref<36x64xf32, #tpu.memory_space<vmem>>, vector<16x16xf32>
    tpu.vector_store %arg5[%c1_14, %c32], %9 {strides = array<i32>} : memref<36x64xf32, #tpu.memory_space<vmem>>, vector<16x16xf32>,
    %c0_15 = arith.constant 0 : index
    %c3 = arith.constant 3 : index
    %c0_16 = arith.constant 0 : index
    %c0_17 = arith.constant 0 : index
    %11 = vector.load %arg1[%c0_15, %c3, %c0_16, %c0_17] : memref<2x4x16x16xf32, #tpu.memory_space<vmem>>, vector<1x1x16x16xf32>
    %12 = vector.shape_cast %11 : vector<1x1x16x16xf32> to vector<16x16xf32>
    %c1_18 = arith.constant 1 : index
    %c48 = arith.constant 48 : index
    %13 = vector.load %arg5[%c1_18, %c48] : memref<36x64xf32, #tpu.memory_space<vmem>>, vector<16x16xf32>
    tpu.vector_store %arg5[%c1_18, %c48], %12 {strides = array<i32>} : memref<36x64xf32, #tpu.memory_space<vmem>>, vector<16x16xf32>,
    %c1_19 = arith.constant 1 : index
    %c0_20 = arith.constant 0 : index
    %c0_21 = arith.constant 0 : index
    %c0_22 = arith.constant 0 : index
    %14 = vector.load %arg1[%c1_19, %c0_20, %c0_21, %c0_22] : memref<2x4x16x16xf32, #tpu.memory_space<vmem>>, vector<1x1x16x16xf32>
    %15 = vector.shape_cast %14 : vector<1x1x16x16xf32> to vector<16x16xf32>
    %c19 = arith.constant 19 : index
    %c0_23 = arith.constant 0 : index
    %16 = vector.load %arg5[%c19, %c0_23] : memref<36x64xf32, #tpu.memory_space<vmem>>, vector<16x16xf32>
    tpu.vector_store %arg5[%c19, %c0_23], %15 {strides = array<i32>} : memref<36x64xf32, #tpu.memory_space<vmem>>, vector<16x16xf32>,
    %c1_24 = arith.constant 1 : index
    %c1_25 = arith.constant 1 : index
    %c0_26 = arith.constant 0 : index
    %c0_27 = arith.constant 0 : index
    %17 = vector.load %arg1[%c1_24, %c1_25, %c0_26, %c0_27] : memref<2x4x16x16xf32, #tpu.memory_space<vmem>>, vector<1x1x16x16xf32>
    %18 = vector.shape_cast %17 : vector<1x1x16x16xf32> to vector<16x16xf32>
    %c19_28 = arith.constant 19 : index
    %c16_29 = arith.constant 16 : index
    %19 = vector.load %arg5[%c19_28, %c16_29] : memref<36x64xf32, #tpu.memory_space<vmem>>, vector<16x16xf32>
    tpu.vector_store %arg5[%c19_28, %c16_29], %18 {strides = array<i32>} : memref<36x64xf32, #tpu.memory_space<vmem>>, vector<16x16xf32>,
    %c1_30 = arith.constant 1 : index
    %c2_31 = arith.constant 2 : index
    %c0_32 = arith.constant 0 : index
    %c0_33 = arith.constant 0 : index
    %20 = vector.load %arg1[%c1_30, %c2_31, %c0_32, %c0_33] : memref<2x4x16x16xf32, #tpu.memory_space<vmem>>, vector<1x1x16x16xf32>
    %21 = vector.shape_cast %20 : vector<1x1x16x16xf32> to vector<16x16xf32>
    %c19_34 = arith.constant 19 : index
    %c32_35 = arith.constant 32 : index
    %22 = vector.load %arg5[%c19_34, %c32_35] : memref<36x64xf32, #tpu.memory_space<vmem>>, vector<16x16xf32>
    tpu.vector_store %arg5[%c19_34, %c32_35], %21 {strides = array<i32>} : memref<36x64xf32, #tpu.memory_space<vmem>>, vector<16x16xf32>,
    %c1_36 = arith.constant 1 : index
    %c3_37 = arith.constant 3 : index
    %c0_38 = arith.constant 0 : index
    %c0_39 = arith.constant 0 : index
    %23 = vector.load %arg1[%c1_36, %c3_37, %c0_38, %c0_39] : memref<2x4x16x16xf32, #tpu.memory_space<vmem>>, vector<1x1x16x16xf32>
    %24 = vector.shape_cast %23 : vector<1x1x16x16xf32> to vector<16x16xf32>
    %c19_40 = arith.constant 19 : index
    %c48_41 = arith.constant 48 : index
    %25 = vector.load %arg5[%c19_40, %c48_41] : memref<36x64xf32, #tpu.memory_space<vmem>>, vector<16x16xf32>
    tpu.vector_store %arg5[%c19_40, %c48_41], %24 {strides = array<i32>} : memref<36x64xf32, #tpu.memory_space<vmem>>, vector<16x16xf32>,
    %c0_42 = arith.constant 0 : index
    %c0_43 = arith.constant 0 : index
    %26 = vector.load %arg5[%c0_42, %c0_43] : memref<36x64xf32, #tpu.memory_space<vmem>>, vector<34x64xf32>
    %c1_44 = arith.constant 1 : index
    %c0_45 = arith.constant 0 : index
    %27 = vector.load %arg5[%c1_44, %c0_45] : memref<36x64xf32, #tpu.memory_space<vmem>>, vector<34x64xf32>
    %c2_46 = arith.constant 2 : index
    %c0_47 = arith.constant 0 : index
    %28 = vector.load %arg5[%c2_46, %c0_47] : memref<36x64xf32, #tpu.memory_space<vmem>>, vector<34x64xf32>
    %29 = tpu.concatenate %26, %27, %28 in 1 : vector<34x64xf32>, vector<34x64xf32>, vector<34x64xf32> -> vector<34x192xf32>
    %c0_48 = arith.constant 0 : index
    %c0_49 = arith.constant 0 : index
    %30 = vector.load %arg2[%c0_48, %c0_49] : memref<192x128xf32, #tpu.memory_space<vmem>>, vector<192x128xf32>
    %cst_50 = arith.constant dense<0.000000e+00> : vector<34x128xf32>
    %31 = tpu.matmul %29, %30, %cst_50 {dimension_numbers = #tpu.dot_dimension_numbers<[1], [0], [0], [1], [0, 0, 1, 1], [], []>} : vector<34x192xf32>, vector<192x128xf32>, vector<34x128xf32> -> vector<34x128xf32>
    %c0_51 = arith.constant 0 : index
    %c0_52 = arith.constant 0 : index
    %32 = vector.load %arg3[%c0_51, %c0_52] : memref<1x128xf32, #tpu.memory_space<vmem>>, vector<1x128xf32>
    %33 = vector.broadcast %32 : vector<1x128xf32> to vector<34x128xf32>
    %34 = arith.addf %31, %33 : vector<34x128xf32>
    %cst_53 = arith.constant 0.000000e+00 : f32
    %35 = vector.broadcast %cst_53 : f32 to vector<34x128xf32>
    %36 = arith.maximumf %34, %35 : vector<34x128xf32>
    %c1_54 = arith.constant 1 : index
    %c0_55 = arith.constant 0 : index
    %37 = vector.load %arg5[%c1_54, %c0_55] : memref<36x64xf32, #tpu.memory_space<vmem>>, vector<16x64xf32>
    %38 = vector.extract_strided_slice %36 {offsets = [0, 0], sizes = [16, 128], strides = [1, 1]} : vector<34x128xf32> to vector<16x128xf32>
    %39 = tpu.concatenate %37, %38 in 1 : vector<16x64xf32>, vector<16x128xf32> -> vector<16x192xf32>
    %c0_56 = arith.constant 0 : index
    %c0_57 = arith.constant 0 : index
    %c0_58 = arith.constant 0 : index
    %40 = vector.load %arg4[%c0_56, %c0_57, %c0_58] : memref<2x16x192xf32, #tpu.memory_space<vmem>>, vector<1x16x192xf32>
    %41 = vector.shape_cast %40 : vector<1x16x192xf32> to vector<16x192xf32>
    %42 = vector.shape_cast %39 : vector<16x192xf32> to vector<1x16x192xf32>
    tpu.vector_store %arg4[%c0_56, %c0_57, %c0_58], %42 {strides = array<i32>} : memref<2x16x192xf32, #tpu.memory_space<vmem>>, vector<1x16x192xf32>,
    %c19_59 = arith.constant 19 : index
    %c0_60 = arith.constant 0 : index
    %43 = vector.load %arg5[%c19_59, %c0_60] : memref<36x64xf32, #tpu.memory_space<vmem>>, vector<16x64xf32>
    %44 = vector.extract_strided_slice %36 {offsets = [18, 0], sizes = [16, 128], strides = [1, 1]} : vector<34x128xf32> to vector<16x128xf32>
    %45 = tpu.concatenate %43, %44 in 1 : vector<16x64xf32>, vector<16x128xf32> -> vector<16x192xf32>
    %c1_61 = arith.constant 1 : index
    %c0_62 = arith.constant 0 : index
    %c0_63 = arith.constant 0 : index
    %46 = vector.load %arg4[%c1_61, %c0_62, %c0_63] : memref<2x16x192xf32, #tpu.memory_space<vmem>>, vector<1x16x192xf32>
    %47 = vector.shape_cast %46 : vector<1x16x192xf32> to vector<16x192xf32>
    %48 = vector.shape_cast %45 : vector<16x192xf32> to vector<1x16x192xf32>
    tpu.vector_store %arg4[%c1_61, %c0_62, %c0_63], %48 {strides = array<i32>} : memref<2x16x192xf32, #tpu.memory_space<vmem>>, vector<1x16x192xf32>,
    return
  }
  func.func @transform_0(%arg0: i32) -> (i32, i32, i32, i32) {
    %c0_i32 = arith.constant 0 : i32
    %c0_i32_0 = arith.constant 0 : i32
    %c0_i32_1 = arith.constant 0 : i32
    %c0_i32_2 = arith.constant 0 : i32
    %c0_i32_3 = arith.constant 0 : i32
    return %c0_i32, %c0_i32_0, %c0_i32_1, %c0_i32_2 : i32, i32, i32, i32
  }
  func.func @transform_1(%arg0: i32) -> (i32, i32) {
    %c0_i32 = arith.constant 0 : i32
    %c0_i32_0 = arith.constant 0 : i32
    %c0_i32_1 = arith.constant 0 : i32
    return %c0_i32, %c0_i32_0 : i32, i32
  }
  func.func @transform_2(%arg0: i32) -> (i32, i32) {
    %c0_i32 = arith.constant 0 : i32
    %c0_i32_0 = arith.constant 0 : i32
    %c0_i32_1 = arith.constant 0 : i32
    return %c0_i32, %c0_i32_0 : i32, i32
  }
  func.func @transform_3(%arg0: i32) -> (i32, i32, i32) {
    %c0_i32 = arith.constant 0 : i32
    %c0_i32_0 = arith.constant 0 : i32
    %c0_i32_1 = arith.constant 0 : i32
    %c0_i32_2 = arith.constant 0 : i32
    return %c0_i32, %c0_i32_0, %c0_i32_1 : i32, i32, i32
  }
}

</mosaic_0001>

<llo_original>
// kernel: tpu_custom_call.1
$region0: #{tpu_custom_call.1}
  #allocation0 [shape = 'u32[]', space=smem, size = 0x4, offset = 0x4, fixed_abs, tag = 'smem constant byte address 0x4 - core index']
  #allocation1 [shape = 'u32[144,128]{1,0:T(1,128)}', space=vmem, size = 0x12000, scoped, tag = 'internal scratch']
  #allocation2 [shape = 'f32[36,64]{1,0:T(8,128)}', space=vmem, size = 0x5000, scoped, tag = 'scratch operand']
  %s0 = inlined_call_operand.hbm [shape: f32[2,4,16,16], index: 0, kind: input, shape index: {}]
  %s1 = inlined_call_operand.hbm [shape: f32[192,128], index: 1, kind: input, shape index: {}]
  %s2 = inlined_call_operand.vmem [shape: f32[1,128], index: 2, kind: input, shape index: {}]
  %s3 = inlined_call_operand.hbm [shape: f32[2,16,192], index: 3, kind: output, shape index: {}]
  %s4 = sld [smem:[#allocation0]]
  $region30: #{tpu_custom_call.1} parent=0
    _
  %s6 = ssub.s32 1, %s4
  %s7 = scalar_select 0, %s6, %s4
  $region1: #{tpu_custom_call.1} parent=0
    #allocation3 [shape = 'u8[65536]{0}', space=vmem, size = 0x10000, scoped, tag = 'input window, operand 0, single buffered']
    #allocation4 [shape = 's32[1]{0}', space=sflag, size = 0x4, scoped, tag = 'scoped memory for tpu_custom_call.1']
    #allocation5 [shape = 's32[1]{0}', space=sflag, size = 0x4, scoped, tag = 'scoped memory for tpu_custom_call.1']
    #allocation6 [shape = 'u8[98304]{0}', space=vmem, size = 0x18000, scoped, tag = 'input window, operand 1, single buffered']
    #allocation7 [shape = 's32[1]{0}', space=sflag, size = 0x4, scoped, tag = 'scoped memory for tpu_custom_call.1']
    #allocation8 [shape = 'u8[32768]{0}', space=vmem, size = 0x8000, scoped, tag = 'output window, operand 0, single buffered']
    %8 = vsyncpa [#allocation4], 0
    %9 = vsyncpa [#allocation7], 0
    %10 = vsyncpa [#allocation5], 0
    // Predicated region
    $region2: #{tpu_custom_call.1} parent=1 // pred_check
      _
    $region3: #{tpu_custom_call.1} parent=1 // pred_check_branch
      %12 = sbr.rel (0) target = $region5
    $region4: #{tpu_custom_call.1} parent=1 // pred_region
      %s14 = ssub.s32 2048, 2048
      %15 = vsyncadd [#allocation4], %s14
      %s16 = sshll.u32 [#allocation3], 4
      %s17 = int_to_ptr.vmem [resolvable:$true] %s16
      %22 = dma.hbm_to_vmem [thread:$0]  %s0, 2048, %s17, [#allocation4], 128, 128, 8
    $region5: #{tpu_custom_call.1} parent=1 // pred_fallthru
      _
    // Predicated region
    $region6: #{tpu_custom_call.1} parent=1 // pred_check
      _
    $region7: #{tpu_custom_call.1} parent=1 // pred_check_branch
      %24 = sbr.rel (0) target = $region9
    $region8: #{tpu_custom_call.1} parent=1 // pred_region
      %s26 = ssub.s32 3072, 3072
      %27 = vsyncadd [#allocation7], %s26
      %s28 = sshll.u32 [#allocation6], 4
      %s29 = int_to_ptr.vmem [resolvable:$true] %s28
      %34 = dma.hbm_to_vmem [thread:$0]  %s1, 3072, %s29, [#allocation7], 128, 128, 8
    $region9: #{tpu_custom_call.1} parent=1 // pred_fallthru
      _
    // Predicated region
    $region10: #{tpu_custom_call.1} parent=1 // pred_check
      _
    $region11: #{tpu_custom_call.1} parent=1 // pred_check_branch
      %36 = sbr.rel (0) target = $region13
    $region12: #{tpu_custom_call.1} parent=1 // pred_region
      _
    $region13: #{tpu_custom_call.1} parent=1 // pred_fallthru
      _
    // Predicated region
    $region14: #{tpu_custom_call.1} parent=1 // pred_check
      _
    $region15: #{tpu_custom_call.1} parent=1 // pred_check_branch
      %38 = sbr.rel (0) target = $region17
    $region16: #{tpu_custom_call.1} parent=1 // pred_region
      %39 = dma.done [#allocation4], 2048
    $region17: #{tpu_custom_call.1} parent=1 // pred_fallthru
      _
    // Predicated region
    $region18: #{tpu_custom_call.1} parent=1 // pred_check
      _
    $region19: #{tpu_custom_call.1} parent=1 // pred_check_branch
      %41 = sbr.rel (0) target = $region21
    $region20: #{tpu_custom_call.1} parent=1 // pred_region
      %42 = dma.done [#allocation7], 3072
    $region21: #{tpu_custom_call.1} parent=1 // pred_fallthru
      _
    %vm43 = vcmask 523264
    %44 = vst.msk [vmem:[#allocation2] sm:$0xff] %vm43, 0.0
    %45 = vst.msk [vmem:[#allocation2 + $0x8] sm:$0xff] %vm43, 0.0
    %46 = vst.msk [vmem:[#allocation2 + $0x10] sm:$0xff] %vm43, 0.0
    %47 = vst.msk [vmem:[#allocation2 + $0x18] sm:$0xff] %vm43, 0.0
    %vm48 = vcmask 519168
    %49 = vst.msk [vmem:[#allocation2 + $0x20] sm:$0xf] %vm48, 0.0
    %v50 = vld [vmem:[#allocation3] sm:$0xff]
    %v51 = vld [vmem:[#allocation3 + $0x8] sm:$0xff]
    %vm52 = vcmask 130048
    %53 = vst.msk [vmem:[#allocation2 + $0x1] sm:$0xff] %vm52, %v50
    %54 = vst.msk [vmem:[#allocation2 + $0x9] sm:$0xff] %vm52, %v51
    %s55 = scalar_lea.vmem [#allocation3], 16
    %v56 = vld [vmem:[%s55] sm:$0xff]
    %v57 = vld [vmem:[%s55 + $0x8] sm:$0xff]
    %60 = vrot.lane.b32.xlu0 %v56, 16
    %v61 = vpop.permute.xlu0 %60
    %62 = vrot.lane.b32.xlu0 %v57, 16
    %v63 = vpop.permute.xlu0 %62
    %vm66 = vcmask 261248
    %67 = vst.msk [vmem:[#allocation2 + $0x1] sm:$0xff] %vm66, %v61
    %68 = vst.msk [vmem:[#allocation2 + $0x9] sm:$0xff] %vm66, %v63
    %s69 = scalar_lea.vmem [#allocation3], 32
    %v70 = vld [vmem:[%s69] sm:$0xff]
    %v71 = vld [vmem:[%s69 + $0x8] sm:$0xff]
    %74 = vrot.lane.b32.xlu0 %v70, 32
    %v75 = vpop.permute.xlu0 %74
    %76 = vrot.lane.b32.xlu0 %v71, 32
    %v77 = vpop.permute.xlu0 %76
    %vm80 = vcmask 392448
    %81 = vst.msk [vmem:[#allocation2 + $0x1] sm:$0xff] %vm80, %v75
    %82 = vst.msk [vmem:[#allocation2 + $0x9] sm:$0xff] %vm80, %v77
    %s83 = scalar_lea.vmem [#allocation3], 48
    %v84 = vld [vmem:[%s83] sm:$0xff]
    %v85 = vld [vmem:[%s83 + $0x8] sm:$0xff]
    %88 = vrot.lane.b32.xlu0 %v84, 48
    %v89 = vpop.permute.xlu0 %88
    %90 = vrot.lane.b32.xlu0 %v85, 48
    %v91 = vpop.permute.xlu0 %90
    %vm94 = vcmask 523648
    %95 = vst.msk [vmem:[#allocation2 + $0x1] sm:$0xff] %vm94, %v89
    %96 = vst.msk [vmem:[#allocation2 + $0x9] sm:$0xff] %vm94, %v91
    %s97 = scalar_lea.vmem [#allocation3], 64
    %v98 = vld [vmem:[%s97] sm:$0xff]
    %v99 = vld [vmem:[%s97 + $0x8] sm:$0xff]
    %100 = vst.msk [vmem:[#allocation2 + $0x13] sm:$0xff] %vm52, %v98
    %101 = vst.msk [vmem:[#allocation2 + $0x1b] sm:$0xff] %vm52, %v99
    %s102 = scalar_lea.vmem [#allocation3], 80
    %v103 = vld [vmem:[%s102] sm:$0xff]
    %v104 = vld [vmem:[%s102 + $0x8] sm:$0xff]
    %107 = vrot.lane.b32.xlu0 %v103, 16
    %v108 = vpop.permute.xlu0 %107
    %109 = vrot.lane.b32.xlu0 %v104, 16
    %v110 = vpop.permute.xlu0 %109
    %113 = vst.msk [vmem:[#allocation2 + $0x13] sm:$0xff] %vm66, %v108
    %114 = vst.msk [vmem:[#allocation2 + $0x1b] sm:$0xff] %vm66, %v110
    %s115 = scalar_lea.vmem [#allocation3], 96
    %v116 = vld [vmem:[%s115] sm:$0xff]
    %v117 = vld [vmem:[%s115 + $0x8] sm:$0xff]
    %120 = vrot.lane.b32.xlu0 %v116, 32
    %v121 = vpop.permute.xlu0 %120
    %122 = vrot.lane.b32.xlu0 %v117, 32
    %v123 = vpop.permute.xlu0 %122
    %126 = vst.msk [vmem:[#allocation2 + $0x13] sm:$0xff] %vm80, %v121
    %127 = vst.msk [vmem:[#allocation2 + $0x1b] sm:$0xff] %vm80, %v123
    %s128 = scalar_lea.vmem [#allocation3], 112
    %v129 = vld [vmem:[%s128] sm:$0xff]
    %v130 = vld [vmem:[%s128 + $0x8] sm:$0xff]
    %133 = vrot.lane.b32.xlu0 %v129, 48
    %v134 = vpop.permute.xlu0 %133
    %135 = vrot.lane.b32.xlu0 %v130, 48
    %v136 = vpop.permute.xlu0 %135
    %139 = vst.msk [vmem:[#allocation2 + $0x13] sm:$0xff] %vm94, %v134
    %140 = vst.msk [vmem:[#allocation2 + $0x1b] sm:$0xff] %vm94, %v136
    %v141 = vld [vmem:[#allocation2] sm:$0xff]
    %v142 = vld [vmem:[#allocation2 + $0x8] sm:$0xff]
    %v143 = vld [vmem:[#allocation2 + $0x10] sm:$0xff]
    %v144 = vld [vmem:[#allocation2 + $0x18] sm:$0xff]
    %v145 = vld [vmem:[#allocation2 + $0x20] sm:$0x3]
    %v146 = vld [vmem:[#allocation2 + $0x1] sm:$0xff]
    %v147 = vld [vmem:[#allocation2 + $0x9] sm:$0xff]
    %v148 = vld [vmem:[#allocation2 + $0x11] sm:$0xff]
    %v149 = vld [vmem:[#allocation2 + $0x19] sm:$0xff]
    %v150 = vld [vmem:[#allocation2 + $0x21] sm:$0x3]
    %v151 = vld [vmem:[#allocation2 + $0x2] sm:$0xff]
    %v152 = vld [vmem:[#allocation2 + $0xa] sm:$0xff]
    %v153 = vld [vmem:[#allocation2 + $0x12] sm:$0xff]
    %v154 = vld [vmem:[#allocation2 + $0x1a] sm:$0xff]
    %v155 = vld [vmem:[#allocation2 + $0x22] sm:$0x3]
    %161 = vrot.lane.b32.xlu0 %v146, 64
    %v162 = vpop.permute.xlu0 %161
    %163 = vrot.lane.b32.xlu0 %v147, 64
    %v164 = vpop.permute.xlu0 %163
    %165 = vrot.lane.b32.xlu0 %v148, 64
    %v166 = vpop.permute.xlu0 %165
    %167 = vrot.lane.b32.xlu0 %v149, 64
    %v168 = vpop.permute.xlu0 %167
    %169 = vrot.lane.b32.xlu0 %v150, 64
    %v170 = vpop.permute.xlu0 %169
    %v176 = vsel %vm43, %v141, %v162
    %v177 = vsel %vm43, %v142, %v164
    %v178 = vsel %vm43, %v143, %v166
    %v179 = vsel %vm43, %v144, %v168
    %v180 = vsel %vm43, %v145, %v170
    %v181 = vld [vmem:[#allocation6] sm:$0xff]
    %v182 = vld [vmem:[#allocation6 + $0x8] sm:$0xff]
    %v183 = vld [vmem:[#allocation6 + $0x10] sm:$0xff]
    %v184 = vld [vmem:[#allocation6 + $0x18] sm:$0xff]
    %v185 = vld [vmem:[#allocation6 + $0x20] sm:$0xff]
    %v186 = vld [vmem:[#allocation6 + $0x28] sm:$0xff]
    %v187 = vld [vmem:[#allocation6 + $0x30] sm:$0xff]
    %v188 = vld [vmem:[#allocation6 + $0x38] sm:$0xff]
    %v189 = vld [vmem:[#allocation6 + $0x40] sm:$0xff]
    %v190 = vld [vmem:[#allocation6 + $0x48] sm:$0xff]
    %v191 = vld [vmem:[#allocation6 + $0x50] sm:$0xff]
    %v192 = vld [vmem:[#allocation6 + $0x58] sm:$0xff]
    %v193 = vld [vmem:[#allocation6 + $0x60] sm:$0xff]
    %v194 = vld [vmem:[#allocation6 + $0x68] sm:$0xff]
    %v195 = vld [vmem:[#allocation6 + $0x70] sm:$0xff]
    %v196 = vld [vmem:[#allocation6 + $0x78] sm:$0xff]
    %v197 = vld [vmem:[#allocation6 + $0x80] sm:$0xff]
    %v198 = vld [vmem:[#allocation6 + $0x88] sm:$0xff]
    %v199 = vld [vmem:[#allocation6 + $0x90] sm:$0xff]
    %v200 = vld [vmem:[#allocation6 + $0x98] sm:$0xff]
    %v201 = vld [vmem:[#allocation6 + $0xa0] sm:$0xff]
    %v202 = vld [vmem:[#allocation6 + $0xa8] sm:$0xff]
    %v203 = vld [vmem:[#allocation6 + $0xb0] sm:$0xff]
    %v204 = vld [vmem:[#allocation6 + $0xb8] sm:$0xff]
    %v205 = vld [vmem:[%s2] sm:$0x1]
    %v207 = vlaneseq
    %v208 = vshrl.u32 %v207, 7
    %v209 = vsub.s32 0, %v208
    %v210 = vrot.slane %v205, %v209
    %v213 = vsel %vm43, %v151, 0
    %v216 = vsel %vm43, %v152, 0
    %v219 = vsel %vm43, %v153, 0
    %v222 = vsel %vm43, %v154, 0
    %v225 = vsel %vm43, %v155, 0
    %227 = vmatprep.subr.mxu0 0.0
    %228 = vmatpush1.msra.mxu0 %v181
    %229 = vmatprep.subr.mxu0 0.0
    %230 = vmatpush1.msra.mxu0 %v182
    %231 = vmatprep.subr.mxu0 0.0
    %232 = vmatpush1.msra.mxu0 %v183
    %233 = vmatprep.subr.mxu0 0.0
    %234 = vmatpush1.msra.mxu0 %v184
    %235 = vmatprep.subr.mxu0 0.0
    %236 = vmatpush1.msra.mxu0 %v185
    %237 = vmatprep.subr.mxu0 0.0
    %238 = vmatpush1.msra.mxu0 %v186
    %239 = vmatprep.subr.mxu0 0.0
    %240 = vmatpush1.msra.mxu0 %v187
    %241 = vmatprep.subr.mxu0 0.0
    %242 = vmatpush1.msra.mxu0 %v188
    %243 = vmatprep.subr.mxu0 0.0
    %244 = vmatpush1.msra.mxu0 %v189
    %245 = vmatprep.subr.mxu0 0.0
    %246 = vmatpush1.msra.mxu0 %v190
    %247 = vmatprep.subr.mxu0 0.0
    %248 = vmatpush1.msra.mxu0 %v191
    %249 = vmatprep.subr.mxu0 0.0
    %250 = vmatpush1.msra.mxu0 %v192
    %251 = vmatprep.subr.mxu0 0.0
    %252 = vmatpush1.msra.mxu0 %v193
    %253 = vmatprep.subr.mxu0 0.0
    %254 = vmatpush1.msra.mxu0 %v194
    %255 = vmatprep.subr.mxu0 0.0
    %256 = vmatpush1.msra.mxu0 %v195
    %257 = vmatprep.subr.mxu0 0.0
    %258 = vmatpush1.msra.mxu0 %v196
    %259 = vmatprep.subr.mxu0 0.0
    %260 = vmatpush1.msra.mxu0 %v197
    %261 = vmatprep.subr.mxu0 0.0
    %262 = vmatpush1.msra.mxu0 %v198
    %263 = vmatprep.subr.mxu0 0.0
    %264 = vmatpush1.msra.mxu0 %v199
    %265 = vmatprep.subr.mxu0 0.0
    %266 = vmatpush1.msra.mxu0 %v200
    %267 = vmatprep.subr.mxu0 0.0
    %268 = vmatpush1.msra.mxu0 %v201
    %269 = vmatprep.subr.mxu0 0.0
    %270 = vmatpush1.msra.mxu0 %v202
    %271 = vmatprep.subr.mxu0 0.0
    %272 = vmatpush1.msra.mxu0 %v203
    %273 = vmatprep.subr.mxu0 0.0
    %274 = vmatpush1.msra.mxu0 %v204
    %275 = vmatprep.subr.mxu0 0.0
    %276 = vmatpush1.msra.mxu0 0.0
    %277 = vmatprep.subr.mxu0 0.0
    %278 = vmatpush1.msra.mxu0 0.0
    %279 = vmatprep.subr.mxu0 0.0
    %280 = vmatpush1.msra.mxu0 0.0
    %281 = vmatprep.subr.mxu0 0.0
    %282 = vmatpush1.msra.mxu0 0.0
    %283 = vmatprep.subr.mxu0 0.0
    %284 = vmatpush1.msra.mxu0 0.0
    %285 = vmatprep.subr.mxu0 0.0
    %286 = vmatpush1.msra.mxu0 0.0
    %287 = vmatprep.subr.mxu0 0.0
    %288 = vmatpush1.msra.mxu0 0.0
    %289 = vmatprep.subr.mxu0 0.0
    %290 = vmatpush1.msra.mxu0 0.0
    %291 = vmatprep.mubr.f32.mxu0 %v213
    %292 = vmatmul.mubr.f32.gmra.mrb[0].mxu0 %v176
    %v293 = vpop.f32.mrb[0].mxu0
    %v294 = vadd.f32 %v210, %v293
    %v295 = vpop.f32.mrb[0].mxu0
    %296 = vmatprep.mubr.f32.mxu0 %v216
    %297 = vmatmul.mubr.f32.gmra.mrb[0].mxu0 %v177
    %v298 = vpop.f32.mrb[0].mxu0
    %v299 = vadd.f32 %v210, %v298
    %v300 = vpop.f32.mrb[0].mxu0
    %301 = vmatprep.mubr.f32.mxu0 %v219
    %302 = vmatmul.mubr.f32.gmra.mrb[0].mxu0 %v178
    %v303 = vpop.f32.mrb[0].mxu0
    %v304 = vadd.f32 %v210, %v303
    %v305 = vpop.f32.mrb[0].mxu0
    %306 = vmatprep.mubr.f32.mxu0 %v222
    %307 = vmatmul.mubr.f32.gmra.mrb[0].mxu0 %v179
    %v308 = vpop.f32.mrb[0].mxu0
    %v309 = vadd.f32 %v210, %v308
    %v310 = vpop.f32.mrb[0].mxu0
    %311 = vmatprep.mubr.f32.mxu0 %v225
    %312 = vmatmul.mubr.f32.gmra.mrb[0].mxu0 %v180
    %v313 = vpop.f32.mrb[0].mxu0
    %v314 = vadd.f32 %v210, %v313
    %v315 = vpop.f32.mrb[0].mxu0
    %316 = vdwg.mxu0
    %v317 = vmax.f32 %v294, 0.0
    %v318 = vmax.f32 %v299, 0.0
    %v319 = vmax.f32 %v304, 0.0
    %v320 = vmax.f32 %v309, 0.0
    %v321 = vmax.f32 %v314, 0.0
    %v322 = vld [vmem:[#allocation2 + $0x1] sm:$0xff]
    %v323 = vld [vmem:[#allocation2 + $0x9] sm:$0xff]
    %326 = vrot.lane.b32.xlu0 %v317, 64
    %v327 = vpop.permute.xlu0 %326
    %328 = vrot.lane.b32.xlu0 %v318, 64
    %v329 = vpop.permute.xlu0 %328
    %v332 = vsel %vm43, %v322, %v327
    %v333 = vsel %vm43, %v323, %v329
    %334 = vst [vmem:[#allocation8] sm:$0xff] %v332
    %335 = vst.msk [vmem:[#allocation8 + $0x8] sm:$0xff] %vm43, %v327
    %336 = vst [vmem:[#allocation8 + $0x10] sm:$0xff] %v333
    %337 = vst.msk [vmem:[#allocation8 + $0x18] sm:$0xff] %vm43, %v329
    %v338 = vld [vmem:[#allocation2 + $0x13] sm:$0xff]
    %v339 = vld [vmem:[#allocation2 + $0x1b] sm:$0xff]
    %vm343 = vcmask 1045504
    %v344 = vrot.slane %v319, 2
    %v345 = vrot.slane %v320, 2
    %v346 = vsel %vm343, %v344, %v345
    %v347 = vrot.slane %v321, 2
    %v348 = vsel %vm343, %v345, %v347
    %349 = vrot.lane.b32.xlu0 %v346, 64
    %v350 = vpop.permute.xlu0 %349
    %351 = vrot.lane.b32.xlu0 %v348, 64
    %v352 = vpop.permute.xlu0 %351
    %v355 = vsel %vm43, %v338, %v350
    %v356 = vsel %vm43, %v339, %v352
    %s357 = scalar_lea.vmem [#allocation8], 32
    %358 = vst [vmem:[%s357] sm:$0xff] %v355
    %359 = vst.msk [vmem:[%s357 + $0x8] sm:$0xff] %vm43, %v350
    %360 = vst [vmem:[%s357 + $0x10] sm:$0xff] %v356
    %361 = vst.msk [vmem:[%s357 + $0x18] sm:$0xff] %vm43, %v352
    // Predicated region
    $region22: #{tpu_custom_call.1} parent=1 // pred_check
      _
    $region23: #{tpu_custom_call.1} parent=1 // pred_check_branch
      %363 = sbr.rel (0) target = $region25
    $region24: #{tpu_custom_call.1} parent=1 // pred_region
      %s365 = ssub.s32 1024, 1024
      %366 = vsyncadd [#allocation5], %s365
      %s367 = sshll.u32 [#allocation8], 4
      %s368 = int_to_ptr.vmem [resolvable:$true] %s367
      %373 = dma.vmem_to_hbm [thread:$0]  %s368, 1024, %s3, [#allocation5], 256, 256, 16
    $region25: #{tpu_custom_call.1} parent=1 // pred_fallthru
      _
    // Predicated region
    $region26: #{tpu_custom_call.1} parent=1 // pred_check
      _
    $region27: #{tpu_custom_call.1} parent=1 // pred_check_branch
      %375 = sbr.rel (0) target = $region29
    $region28: #{tpu_custom_call.1} parent=1 // pred_region
      %376 = dma.done [#allocation5], 1024
    $region29: #{tpu_custom_call.1} parent=1 // pred_fallthru
      _
    %377 = vsyncpa [#allocation4], 1
    %378 = vsyncpa [#allocation7], 1
    %379 = vsyncpa [#allocation5], 1

</llo_original>
